<compile_context>
chip_gen: v7x
topology: tpu7x:2x2x1
jax: 0.10.0
libtpu: 0.0.40
codegen_flags: <defaults>
</compile_context>

<pallas_src>
import numpy as np
import jax
import jax.numpy as jnp
from jax.experimental import pallas as pl
from jax.experimental.pallas import tpu as pltpu


# ------------------------------ helpers ----------------------------------- #

def _round_up(x, m):
    return (x + m - 1) // m * m


def _pick_spatial_tile(S, max_tile):
    """Largest TS <= max_tile with S % TS == 0 and TS lane-legal
    (multiple of 128, or the full spatial extent)."""
    for d in range(min(max_tile, S), 0, -1):
        if S % d == 0 and (d % 128 == 0 or d == S):
            return d
    return S


# ----------------------------- Pallas kernel ------------------------------ #

def _make_level_kernel(stride):
    """Kernel for one detection level.  `stride` is a compile-time constant."""

    def kernel(x_ref, w_ref, b_ref, selx_ref, sely_ref, iswh_ref, asc_ref,
               gxy_ref, raw_ref, dec_ref):
        # 1x1 conv == matmul on the MXU: (N_pad, C) @ (C, TS) -> (N_pad, TS)
        y = jnp.dot(w_ref[...], x_ref[0],
                    preferred_element_type=jnp.float32) + b_ref[...]
        raw_ref[0] = y                               # raw (pre-sigmoid) output

        # fused sigmoid + YOLO box decode (VPU / EUP)
        s = jax.nn.sigmoid(y)
        a2 = s + s                                   # 2*sigmoid, reused
        # grid coordinate per lane, selected onto the x / y rows
        gadd = selx_ref[...] * gxy_ref[0:1, :] + sely_ref[...] * gxy_ref[1:2, :]
        xy = (a2 + gadd) * stride                    # (2*sig + grid) * stride
        wh = a2 * a2 * asc_ref[...]                  # (2*sig)^2 * anchor*stride
        isxy = selx_ref[...] + sely_ref[...]
        # single arithmetic blend: xy rows -> xy, wh rows -> wh, rest -> sigmoid
        dec_ref[0] = s + isxy * (xy - s) + iswh_ref[...] * (wh - s)

    return kernel


def _detect_level_pallas(x3, w2, b2, selx, sely, iswh, asc, gxy, stride, TS):
    bs, C, S = x3.shape
    N_pad = w2.shape[0]
    n_sp = S // TS

    resident = lambda b, t: (0, 0)
    raw3, dec3 = pl.pallas_call(
        _make_level_kernel(stride),
        grid=(bs, n_sp),
        in_specs=[
            pl.BlockSpec((1, C, TS), lambda b, t: (b, 0, t)),    # x (NCHW, flat HW)
            pl.BlockSpec((N_pad, C), resident),                  # conv weight
            pl.BlockSpec((N_pad, 1), resident),                  # bias
            pl.BlockSpec((N_pad, 1), resident),                  # x-row selector
            pl.BlockSpec((N_pad, 1), resident),                  # y-row selector
            pl.BlockSpec((N_pad, 1), resident),                  # wh-row mask
            pl.BlockSpec((N_pad, 1), resident),                  # anchor*stride
            pl.BlockSpec((2, TS), lambda b, t: (0, t)),          # grid x/y coords
        ],
        out_specs=(
            pl.BlockSpec((1, N_pad, TS), lambda b, t: (b, 0, t)),
            pl.BlockSpec((1, N_pad, TS), lambda b, t: (b, 0, t)),
        ),
        out_shape=(
            jax.ShapeDtypeStruct((bs, N_pad, S), jnp.float32),
            jax.ShapeDtypeStruct((bs, N_pad, S), jnp.float32),
        ),
        compiler_params=pltpu.CompilerParams(
            dimension_semantics=("parallel", "parallel"),
            vmem_limit_bytes=32 * 1024 * 1024,
        ),
    )(x3, w2, b2, selx, sely, iswh, asc, gxy)
    return raw3, dec3


# ------------------------------ JAX wrapper ------------------------------- #

def detect_head_forward(xs, weights, biases, anchors, strides, nc,
                        *, spatial_tile=512, matmul_dtype=jnp.bfloat16):
    """Equivalent of Detect_head.forward in inference mode.

    xs[i]     : (bs, ch[i], H_i, W_i)  float32  (NCHW, like PyTorch)
    weights[i]: (na*no, ch[i], 1, 1)   conv 1x1 weight
    biases[i] : (na*no,)
    anchors   : (nl, na, 2)
    Returns (z_cat, raw_list): z_cat (bs, sum(na*H*W), no); raw_list[i]
    (bs, na, H, W, no)  (== x[i] after the PyTorch view/permute).
    """
    nl = len(xs)
    na = anchors.shape[1]
    no = nc + 5
    N = na * no
    N_pad = _round_up(N, 8)
    anchors_np = np.asarray(anchors, np.float32)

    z, raws = [], []
    for i in range(nl):
        x = xs[i]
        bs, C, ny, nx = x.shape
        S = ny * nx
        TS = _pick_spatial_tile(S, spatial_tile)
        stride = float(strides[i])

        # NCHW feature map with flattened spatial axis (free reshape, no copy).
        x3 = x.reshape(bs, C, S).astype(matmul_dtype)
        w2 = jnp.asarray(weights[i]).reshape(N, C)
        w2 = jnp.pad(w2, ((0, N_pad - N), (0, 0))).astype(matmul_dtype)
        b2 = jnp.pad(jnp.asarray(biases[i], jnp.float32).reshape(N, 1),
                     ((0, N_pad - N), (0, 0)))

        # per-output-channel constants: channel c -> anchor a=c//no, field k=c%no
        selx = np.zeros((N_pad, 1), np.float32)
        sely = np.zeros((N_pad, 1), np.float32)
        iswh = np.zeros((N_pad, 1), np.float32)
        asc = np.zeros((N_pad, 1), np.float32)
        for c in range(N):
            a, k = divmod(c, no)
            if k == 0:
                selx[c, 0] = 1.0
            elif k == 1:
                sely[c, 0] = 1.0
            elif k in (2, 3):
                iswh[c, 0] = 1.0
                asc[c, 0] = anchors_np[i, a, k - 2] * stride

        # grid x/y coordinate per flattened spatial position (tiny: 2 x H*W)
        sp = np.arange(S)
        gxy = np.stack([(sp % nx).astype(np.float32) - 0.5,
                        (sp // nx).astype(np.float32) - 0.5], axis=0)

        raw3, dec3 = _detect_level_pallas(
            x3, w2, b2, jnp.asarray(selx), jnp.asarray(sely), jnp.asarray(iswh),
            jnp.asarray(asc), jnp.asarray(gxy), stride, TS)

        # back to PyTorch layouts (same permute the torch module itself does)
        raw = raw3[:, :N, :].reshape(bs, na, no, ny, nx).transpose(0, 1, 3, 4, 2)
        dec = dec3[:, :N, :].reshape(bs, na, no, ny, nx).transpose(0, 1, 3, 4, 2)
        raws.append(raw)                                   # (bs, na, ny, nx, no)
        z.append(dec.reshape(bs, na * ny * nx, no))
    return jnp.concatenate(z, axis=1), raws


# -------------------------- pure-JAX reference ----------------------------- #

def reference_forward(xs, weights, biases, anchors, strides, nc,
                      matmul_dtype=jnp.float32):
    nl = len(xs)
    na = anchors.shape[1]
    no = nc + 5
    z, raws = [], []
    for i in range(nl):
        x = xs[i]
        bs, C, ny, nx = x.shape
        w = jnp.asarray(weights[i])[:, :, 0, 0]             # (N, C)
        y = jnp.einsum('bchw,oc->bohw', x.astype(matmul_dtype),
                       w.astype(matmul_dtype),
                       preferred_element_type=jnp.float32)
        y = y + jnp.asarray(biases[i])[None, :, None, None]
        y = y.reshape(bs, na, no, ny, nx).transpose(0, 1, 3, 4, 2)
        raws.append(y)
        s = jax.nn.sigmoid(y)
        yv, xv = jnp.meshgrid(jnp.arange(ny, dtype=jnp.float32),
                              jnp.arange(nx, dtype=jnp.float32), indexing='ij')
        grid = (jnp.stack([xv, yv], axis=-1) - 0.5)[None, None]
        anchor_grid = (anchors[i] * strides[i]).reshape(1, na, 1, 1, 2)
        xy = (s[..., 0:2] * 2 + grid) * strides[i]
        wh = (s[..., 2:4] * 2) ** 2 * anchor_grid
        dec = jnp.concatenate([xy, wh, s[..., 4:]], axis=-1)
        z.append(dec.reshape(bs, na * ny * nx, no))
    return jnp.concatenate(z, axis=1), raws


# ------------------------------ parameters --------------------------------- #

def init_params(key, ch, na, no):
    weights, biases = [], []
    for c in ch:
        key, kw, kb = jax.random.split(key, 3)
        weights.append(0.1 * jax.random.normal(kw, (na * no, c, 1, 1), jnp.float32))
        biases.append(0.1 * jax.random.normal(kb, (na * no,), jnp.float32))
    return weights, biases


if __name__ == "__main__":
    nc = 4
    anchors_py = ((10, 13, 16, 30, 33, 23),
                  (30, 61, 62, 45, 59, 119),
                  (116, 90, 156, 198, 373, 326))
    strides = (8.0, 16.0, 32.0)
    nl = len(anchors_py)
    na = len(anchors_py[0]) // 2
    no = nc + 5
    anchors = jnp.asarray(anchors_py, jnp.float32).reshape(nl, na, 2)

    ch = (4, 8, 16)
    spatial = ((16, 16), (8, 8), (4, 4))
    bs = 2

    key = jax.random.PRNGKey(0)
    keys = jax.random.split(key, nl + 1)
    xs = [jax.random.normal(keys[i], (bs, ch[i], spatial[i][0], spatial[i][1]),
                            jnp.float32) for i in range(nl)]
    weights, biases = init_params(keys[nl], ch, na, no)

    # spatial_tile=128 so the 16x16 level exercises a multi-tile (2, 2) grid.
    z, raw = detect_head_forward(xs, weights, biases, anchors, strides, nc,
                                 spatial_tile=128)
    z = jax.block_until_ready(z)

    # Tight check vs. a reference using the same bf16 matmul inputs.
    z_bf, raw_bf = reference_forward(xs, weights, biases, anchors, strides, nc,
                                     matmul_dtype=jnp.bfloat16)
    assert np.allclose(np.asarray(z), np.asarray(z_bf), rtol=1e-3, atol=1e-3)
    for a, b in zip(raw, raw_bf):
        assert np.allclose(np.asarray(a), np.asarray(b), rtol=1e-3, atol=1e-3)

    # Loose fidelity check vs. the full-f32 reference (bounds bf16 matmul error).
    z_32, raw_32 = reference_forward(xs, weights, biases, anchors, strides, nc,
                                     matmul_dtype=jnp.float32)
    assert np.allclose(np.asarray(z), np.asarray(z_32), rtol=2e-2, atol=1.5e-1)
    for a, b in zip(raw, raw_32):
        assert np.allclose(np.asarray(a), np.asarray(b), rtol=2e-2, atol=3e-2)

    print("KERNEL_OK")
</pallas_src>

<mosaic_0001>
module attributes {stable_mosaic.version = 11 : i64} {
  func.func @kernel(%arg0: i32, %arg1: i32, %arg2: memref<1x4x128xbf16, #tpu.memory_space<vmem>>, %arg3: memref<32x4xbf16, #tpu.memory_space<vmem>>, %arg4: memref<32x1xf32, #tpu.memory_space<vmem>>, %arg5: memref<32x1xf32, #tpu.memory_space<vmem>>, %arg6: memref<32x1xf32, #tpu.memory_space<vmem>>, %arg7: memref<32x1xf32, #tpu.memory_space<vmem>>, %arg8: memref<32x1xf32, #tpu.memory_space<vmem>>, %arg9: memref<2x128xf32, #tpu.memory_space<vmem>>, %arg10: memref<1x32x128xf32, #tpu.memory_space<vmem>>, %arg11: memref<1x32x128xf32, #tpu.memory_space<vmem>>) attributes {dimension_semantics = [#tpu.dimension_semantics<parallel>, #tpu.dimension_semantics<parallel>], iteration_bounds = array<i64: 2, 2>, scalar_prefetch = 0 : i64, scratch_operands = 0 : i64, tpu.core_type = #tpu.core_type<tc>, window_params = [{transform_indices = @transform_0, window_bounds = array<i64: 1, 4, 128>}, {pipeline_mode = #tpu.pipeline_mode<synchronous>, transform_indices = @transform_1, window_bounds = array<i64: 32, 4>}, {pipeline_mode = #tpu.pipeline_mode<synchronous>, transform_indices = @transform_2, window_bounds = array<i64: 32, 1>}, {pipeline_mode = #tpu.pipeline_mode<synchronous>, transform_indices = @transform_3, window_bounds = array<i64: 32, 1>}, {pipeline_mode = #tpu.pipeline_mode<synchronous>, transform_indices = @transform_4, window_bounds = array<i64: 32, 1>}, {pipeline_mode = #tpu.pipeline_mode<synchronous>, transform_indices = @transform_5, window_bounds = array<i64: 32, 1>}, {pipeline_mode = #tpu.pipeline_mode<synchronous>, transform_indices = @transform_6, window_bounds = array<i64: 32, 1>}, {transform_indices = @transform_7, window_bounds = array<i64: 2, 128>}, {transform_indices = @transform_8, window_bounds = array<i64: 1, 32, 128>}, {transform_indices = @transform_9, window_bounds = array<i64: 1, 32, 128>}]} {
    %c0 = arith.constant 0 : index
    %c0_0 = arith.constant 0 : index
    %0 = vector.load %arg3[%c0, %c0_0] : memref<32x4xbf16, #tpu.memory_space<vmem>>, vector<32x4xbf16>
    %c0_1 = arith.constant 0 : index
    %c0_2 = arith.constant 0 : index
    %c0_3 = arith.constant 0 : index
    %1 = vector.load %arg2[%c0_1, %c0_2, %c0_3] : memref<1x4x128xbf16, #tpu.memory_space<vmem>>, vector<1x4x128xbf16>
    %2 = vector.shape_cast %1 : vector<1x4x128xbf16> to vector<4x128xbf16>
    %cst = arith.constant dense<0.000000e+00> : vector<32x128xf32>
    %3 = tpu.matmul %0, %2, %cst {dimension_numbers = #tpu.dot_dimension_numbers<[1], [0], [0], [1], [0, 0, 1, 1], [], []>} : vector<32x4xbf16>, vector<4x128xbf16>, vector<32x128xf32> -> vector<32x128xf32>
    %c0_4 = arith.constant 0 : index
    %c0_5 = arith.constant 0 : index
    %4 = vector.load %arg4[%c0_4, %c0_5] : memref<32x1xf32, #tpu.memory_space<vmem>>, vector<32x1xf32>
    %5 = vector.broadcast %4 : vector<32x1xf32> to vector<32x128xf32>
    %6 = arith.addf %3, %5 : vector<32x128xf32>
    %c0_6 = arith.constant 0 : index
    %c0_7 = arith.constant 0 : index
    %c0_8 = arith.constant 0 : index
    %7 = vector.load %arg10[%c0_6, %c0_7, %c0_8] : memref<1x32x128xf32, #tpu.memory_space<vmem>>, vector<1x32x128xf32>
    %8 = vector.shape_cast %7 : vector<1x32x128xf32> to vector<32x128xf32>
    %9 = vector.shape_cast %6 : vector<32x128xf32> to vector<1x32x128xf32>
    tpu.vector_store %arg10[%c0_6, %c0_7, %c0_8], %9 {strides = array<i32>} : memref<1x32x128xf32, #tpu.memory_space<vmem>>, vector<1x32x128xf32>,
    %10 = arith.negf %6 : vector<32x128xf32>
    %11 = math.exp %10 : vector<32x128xf32>
    %cst_9 = arith.constant 1.000000e+00 : f32
    %12 = vector.broadcast %cst_9 : f32 to vector<32x128xf32>
    %13 = arith.addf %12, %11 : vector<32x128xf32>
    %14 = arith.divf %12, %13 : vector<32x128xf32>
    %15 = arith.addf %14, %14 : vector<32x128xf32>
    %c0_10 = arith.constant 0 : index
    %c0_11 = arith.constant 0 : index
    %16 = vector.load %arg5[%c0_10, %c0_11] : memref<32x1xf32, #tpu.memory_space<vmem>>, vector<32x1xf32>
    %c0_12 = arith.constant 0 : index
    %c0_13 = arith.constant 0 : index
    %17 = vector.load %arg9[%c0_12, %c0_13] : memref<2x128xf32, #tpu.memory_space<vmem>>, vector<1x128xf32>
    %18 = vector.broadcast %16 : vector<32x1xf32> to vector<32x128xf32>
    %19 = vector.broadcast %17 : vector<1x128xf32> to vector<32x128xf32>
    %20 = arith.mulf %18, %19 : vector<32x128xf32>
    %c0_14 = arith.constant 0 : index
    %c0_15 = arith.constant 0 : index
    %21 = vector.load %arg6[%c0_14, %c0_15] : memref<32x1xf32, #tpu.memory_space<vmem>>, vector<32x1xf32>
    %c1 = arith.constant 1 : index
    %c0_16 = arith.constant 0 : index
    %22 = vector.load %arg9[%c1, %c0_16] : memref<2x128xf32, #tpu.memory_space<vmem>>, vector<1x128xf32>
    %23 = vector.broadcast %21 : vector<32x1xf32> to vector<32x128xf32>
    %24 = vector.broadcast %22 : vector<1x128xf32> to vector<32x128xf32>
    %25 = arith.mulf %23, %24 : vector<32x128xf32>
    %26 = arith.addf %20, %25 : vector<32x128xf32>
    %27 = arith.addf %15, %26 : vector<32x128xf32>
    %cst_17 = arith.constant 8.000000e+00 : f32
    %28 = vector.broadcast %cst_17 : f32 to vector<32x128xf32>
    %29 = arith.mulf %27, %28 : vector<32x128xf32>
    %30 = arith.mulf %15, %15 : vector<32x128xf32>
    %c0_18 = arith.constant 0 : index
    %c0_19 = arith.constant 0 : index
    %31 = vector.load %arg8[%c0_18, %c0_19] : memref<32x1xf32, #tpu.memory_space<vmem>>, vector<32x1xf32>
    %32 = vector.broadcast %31 : vector<32x1xf32> to vector<32x128xf32>
    %33 = arith.mulf %30, %32 : vector<32x128xf32>
    %c0_20 = arith.constant 0 : index
    %c0_21 = arith.constant 0 : index
    %34 = vector.load %arg5[%c0_20, %c0_21] : memref<32x1xf32, #tpu.memory_space<vmem>>, vector<32x1xf32>
    %c0_22 = arith.constant 0 : index
    %c0_23 = arith.constant 0 : index
    %35 = vector.load %arg6[%c0_22, %c0_23] : memref<32x1xf32, #tpu.memory_space<vmem>>, vector<32x1xf32>
    %36 = arith.addf %34, %35 : vector<32x1xf32>
    %37 = arith.subf %29, %14 : vector<32x128xf32>
    %38 = vector.broadcast %36 : vector<32x1xf32> to vector<32x128xf32>
    %39 = arith.mulf %38, %37 : vector<32x128xf32>
    %40 = arith.addf %14, %39 : vector<32x128xf32>
    %c0_24 = arith.constant 0 : index
    %c0_25 = arith.constant 0 : index
    %41 = vector.load %arg7[%c0_24, %c0_25] : memref<32x1xf32, #tpu.memory_space<vmem>>, vector<32x1xf32>
    %42 = arith.subf %33, %14 : vector<32x128xf32>
    %43 = vector.broadcast %41 : vector<32x1xf32> to vector<32x128xf32>
    %44 = arith.mulf %43, %42 : vector<32x128xf32>
    %45 = arith.addf %40, %44 : vector<32x128xf32>
    %c0_26 = arith.constant 0 : index
    %c0_27 = arith.constant 0 : index
    %c0_28 = arith.constant 0 : index
    %46 = vector.load %arg11[%c0_26, %c0_27, %c0_28] : memref<1x32x128xf32, #tpu.memory_space<vmem>>, vector<1x32x128xf32>
    %47 = vector.shape_cast %46 : vector<1x32x128xf32> to vector<32x128xf32>
    %48 = vector.shape_cast %45 : vector<32x128xf32> to vector<1x32x128xf32>
    tpu.vector_store %arg11[%c0_26, %c0_27, %c0_28], %48 {strides = array<i32>} : memref<1x32x128xf32, #tpu.memory_space<vmem>>, vector<1x32x128xf32>,
    return
  }
  func.func @transform_0(%arg0: i32, %arg1: i32) -> (i32, i32, i32) {
    %c0_i32 = arith.constant 0 : i32
    %c0_i32_0 = arith.constant 0 : i32
    return %arg0, %c0_i32, %arg1 : i32, i32, i32
  }
  func.func @transform_1(%arg0: i32, %arg1: i32) -> (i32, i32) {
    %c0_i32 = arith.constant 0 : i32
    %c0_i32_0 = arith.constant 0 : i32
    %c0_i32_1 = arith.constant 0 : i32
    return %c0_i32, %c0_i32_0 : i32, i32
  }
  func.func @transform_2(%arg0: i32, %arg1: i32) -> (i32, i32) {
    %c0_i32 = arith.constant 0 : i32
    %c0_i32_0 = arith.constant 0 : i32
    %c0_i32_1 = arith.constant 0 : i32
    return %c0_i32, %c0_i32_0 : i32, i32
  }
  func.func @transform_3(%arg0: i32, %arg1: i32) -> (i32, i32) {
    %c0_i32 = arith.constant 0 : i32
    %c0_i32_0 = arith.constant 0 : i32
    %c0_i32_1 = arith.constant 0 : i32
    return %c0_i32, %c0_i32_0 : i32, i32
  }
  func.func @transform_4(%arg0: i32, %arg1: i32) -> (i32, i32) {
    %c0_i32 = arith.constant 0 : i32
    %c0_i32_0 = arith.constant 0 : i32
    %c0_i32_1 = arith.constant 0 : i32
    return %c0_i32, %c0_i32_0 : i32, i32
  }
  func.func @transform_5(%arg0: i32, %arg1: i32) -> (i32, i32) {
    %c0_i32 = arith.constant 0 : i32
    %c0_i32_0 = arith.constant 0 : i32
    %c0_i32_1 = arith.constant 0 : i32
    return %c0_i32, %c0_i32_0 : i32, i32
  }
  func.func @transform_6(%arg0: i32, %arg1: i32) -> (i32, i32) {
    %c0_i32 = arith.constant 0 : i32
    %c0_i32_0 = arith.constant 0 : i32
    %c0_i32_1 = arith.constant 0 : i32
    return %c0_i32, %c0_i32_0 : i32, i32
  }
  func.func @transform_7(%arg0: i32, %arg1: i32) -> (i32, i32) {
    %c0_i32 = arith.constant 0 : i32
    %c0_i32_0 = arith.constant 0 : i32
    return %c0_i32, %arg1 : i32, i32
  }
  func.func @transform_8(%arg0: i32, %arg1: i32) -> (i32, i32, i32) {
    %c0_i32 = arith.constant 0 : i32
    %c0_i32_0 = arith.constant 0 : i32
    return %arg0, %c0_i32, %arg1 : i32, i32, i32
  }
  func.func @transform_9(%arg0: i32, %arg1: i32) -> (i32, i32, i32) {
    %c0_i32 = arith.constant 0 : i32
    %c0_i32_0 = arith.constant 0 : i32
    return %arg0, %c0_i32, %arg1 : i32, i32, i32
  }
}

</mosaic_0001>

<llo_original>
// kernel: tpu_custom_call.1
$region0: #{tpu_custom_call.1}
  #allocation0 [shape = 'u32[]', space=smem, size = 0x4, offset = 0x4, fixed_abs, tag = 'smem constant byte address 0x4 - core index']
  #allocation1 [shape = 'u32[144,128]{1,0:T(1,128)}', space=vmem, size = 0x12000, scoped, tag = 'internal scratch']
  %s0 = inlined_call_operand.vmem [shape: bf16[2,4,256], index: 0, kind: input, shape index: {}]
  %s1 = inlined_call_operand.vmem [shape: bf16[32,4], index: 1, kind: input, shape index: {}]
  %s2 = inlined_call_operand.vmem [shape: f32[32,1], index: 2, kind: input, shape index: {}]
  %s3 = inlined_call_operand.vmem [shape: f32[32,1], index: 3, kind: input, shape index: {}]
  %s4 = inlined_call_operand.vmem [shape: f32[32,1], index: 4, kind: input, shape index: {}]
  %s5 = inlined_call_operand.vmem [shape: f32[32,1], index: 5, kind: input, shape index: {}]
  %s6 = inlined_call_operand.vmem [shape: f32[32,1], index: 6, kind: input, shape index: {}]
  %s7 = inlined_call_operand.vmem [shape: f32[2,256], index: 7, kind: input, shape index: {}]
  %s8 = inlined_call_operand.hbm [shape: f32[2,32,256], index: 8, kind: output, shape index: {0}]
  %s9 = inlined_call_operand.hbm [shape: f32[2,32,256], index: 9, kind: output, shape index: {1}]
  %10 = xla_tuple %s8, %s9
  %s11 = sld [smem:[#allocation0]]
  $region73: #{tpu_custom_call.1} parent=0
    _
  %s13 = ssub.s32 1, %s11
  %s14 = scalar_select 0, %s13, %s11
  $region1: #{tpu_custom_call.1} parent=0
    #allocation2 [shape = 'u8[32768]{0}', space=vmem, size = 0x8000, scoped, tag = 'output window, operand 0']
    #allocation3 [shape = 's32[2]{0}', space=sflag, size = 0x8, scoped, tag = 'scoped memory for tpu_custom_call.1']
    #allocation4 [shape = 'u8[32768]{0}', space=vmem, size = 0x8000, scoped, tag = 'output window, operand 1']
    #allocation5 [shape = 's32[2]{0}', space=sflag, size = 0x8, scoped, tag = 'scoped memory for tpu_custom_call.1']
    %15 = vsyncpa [#allocation3], 0
    %s16 = scalar_lea.sflag [#allocation3], 1
    %17 = vsyncpa %s16, 0
    %18 = vsyncpa [#allocation5], 0
    %s19 = scalar_lea.sflag [#allocation5], 1
    %20 = vsyncpa %s19, 0
    loop: start=0, step=1, limit=6
    $region2: #{tpu_custom_call.1} parent=1 // loop_pre_header
      _
    $region3: #{tpu_custom_call.1} parent=1 // loop_header
      %s22 = sphi 0, %s26
      %p23 = scmp.ge.s32.totalorder %s22, 6
      %s29 = sphi 0, %s41
      %s30 = sphi 0, %s37
      %s31 = sphi 0, %s29
      %s32 = sphi 0, %s30
      %s33 = sphi 0, %s31
      %s34 = sphi 0, %s32
      %s46 = sphi 0, %s48
      %s49 = sphi 0, %s46
      %s50 = sphi 0, %s49
      %s66 = sphi 0, %s50
      %s70 = sphi 0, %s70
      %s72 = sphi 0, %s70
      %s73 = sphi 0, %s72
      %s87 = sphi 0, %s73
      %s91 = sphi 0, %s91
      %s93 = sphi 0, %s91
      %s94 = sphi 0, %s93
      %s108 = sphi 0, %s94
      %s112 = sphi 0, %s112
      %s114 = sphi 0, %s112
      %s115 = sphi 0, %s114
      %s129 = sphi 0, %s115
      %s133 = sphi 0, %s133
      %s135 = sphi 0, %s133
      %s136 = sphi 0, %s135
      %s150 = sphi 0, %s136
      %s154 = sphi 0, %s154
      %s156 = sphi 0, %s154
      %s157 = sphi 0, %s156
      %s171 = sphi 0, %s157
      %s175 = sphi 0, %s175
      %s177 = sphi 0, %s175
      %s178 = sphi 0, %s177
      %s192 = sphi 0, %s178
      %s198 = sphi 0, %s200
      %s201 = sphi 0, %s198
      %s202 = sphi 0, %s201
      %s218 = sphi 0, %s202
      %s226 = sphi 0, %s228
      %s229 = sphi 0, %s226
      %s230 = sphi 0, %s229
      %s246 = sphi 0, %s230
      %s254 = sphi 0, %s256
      %s257 = sphi 0, %s254
      %s258 = sphi 0, %s257
      %s274 = sphi 0, %s258
    $region4: #{tpu_custom_call.1} parent=1 // loop_header_branch
      %25 = sbr.rel (%p23) target = $region8
    $region5: #{tpu_custom_call.1} parent=1 // loop_body
      %s27 = ssub.s32 %s22, 1
      %s28 = ssub.s32 %s22, 2
      %s35 = sadd.s32 1, %s30
      %p36 = scmp.ge.s32.totalorder %s35, 2
      %s37 = scalar_select %p36, 0, %s35
      %s38 = sadd.s32 1, %s29
      %s39 = scalar_select %p36, %s38, %s29
      %p40 = scmp.ge.s32.totalorder %s39, 2
      %s41 = scalar_select %p40, 0, %s39
      %s42 = ssub.s32 %s29, %s41
      %s43 = ssub.s32 %s30, %s37
      %s44 = sor.u32 %s42, %s43
      %p45 = scmp.eq.s32.totalorder %s44, 0
      %s47 = sadd.s32 %s46, 1
      %s48 = scalar_select %p45, %s46, %s47
      %p51 = pneg %p45
      %p52 = scmp.eq.s32.totalorder %s22, 3
      %p53 = por %p51, %p52
      %p54 = scmp.ne.s32.totalorder %s46, %s49
      %p55 = scmp.eq.s32.totalorder %s22, 0
      %p56 = por %p54, %p55
      %p57 = scmp.ne.s32.totalorder %s46, %s49
      %p58 = scmp.eq.s32.totalorder %s27, 3
      %p59 = por %p57, %p58
      %p60 = scmp.ne.s32.totalorder %s49, %s50
      %p61 = scmp.eq.s32.totalorder %s27, 0
      %p62 = por %p60, %p61
      %p63 = scmp.ne.s32.totalorder %s49, %s50
      %p64 = scmp.eq.s32.totalorder %s28, 3
      %p65 = por %p63, %p64
      %p67 = scmp.ne.s32.totalorder %s50, %s66
      %p68 = scmp.eq.s32.totalorder %s28, 0
      %p69 = por %p67, %p68
      %s71 = sadd.s32 %s70, 1
      %p74 = scmp.eq.s32.totalorder %s22, 3
      %p75 = scmp.ne.s32.totalorder %s70, %s72
      %p76 = scmp.eq.s32.totalorder %s22, 0
      %p77 = por %p75, %p76
      %p78 = scmp.ne.s32.totalorder %s70, %s72
      %p79 = scmp.eq.s32.totalorder %s27, 3
      %p80 = por %p78, %p79
      %p81 = scmp.ne.s32.totalorder %s72, %s73
      %p82 = scmp.eq.s32.totalorder %s27, 0
      %p83 = por %p81, %p82
      %p84 = scmp.ne.s32.totalorder %s72, %s73
      %p85 = scmp.eq.s32.totalorder %s28, 3
      %p86 = por %p84, %p85
      %p88 = scmp.ne.s32.totalorder %s73, %s87
      %p89 = scmp.eq.s32.totalorder %s28, 0
      %p90 = por %p88, %p89
      %s92 = sadd.s32 %s91, 1
      %p95 = scmp.eq.s32.totalorder %s22, 3
      %p96 = scmp.ne.s32.totalorder %s91, %s93
      %p97 = scmp.eq.s32.totalorder %s22, 0
      %p98 = por %p96, %p97
      %p99 = scmp.ne.s32.totalorder %s91, %s93
      %p100 = scmp.eq.s32.totalorder %s27, 3
      %p101 = por %p99, %p100
      %p102 = scmp.ne.s32.totalorder %s93, %s94
      %p103 = scmp.eq.s32.totalorder %s27, 0
      %p104 = por %p102, %p103
      %p105 = scmp.ne.s32.totalorder %s93, %s94
      %p106 = scmp.eq.s32.totalorder %s28, 3
      %p107 = por %p105, %p106
      %p109 = scmp.ne.s32.totalorder %s94, %s108
      %p110 = scmp.eq.s32.totalorder %s28, 0
      %p111 = por %p109, %p110
      %s113 = sadd.s32 %s112, 1
      %p116 = scmp.eq.s32.totalorder %s22, 3
      %p117 = scmp.ne.s32.totalorder %s112, %s114
      %p118 = scmp.eq.s32.totalorder %s22, 0
      %p119 = por %p117, %p118
      %p120 = scmp.ne.s32.totalorder %s112, %s114
      %p121 = scmp.eq.s32.totalorder %s27, 3
      %p122 = por %p120, %p121
      %p123 = scmp.ne.s32.totalorder %s114, %s115
      %p124 = scmp.eq.s32.totalorder %s27, 0
      %p125 = por %p123, %p124
      %p126 = scmp.ne.s32.totalorder %s114, %s115
      %p127 = scmp.eq.s32.totalorder %s28, 3
      %p128 = por %p126, %p127
      %p130 = scmp.ne.s32.totalorder %s115, %s129
      %p131 = scmp.eq.s32.totalorder %s28, 0
      %p132 = por %p130, %p131
      %s134 = sadd.s32 %s133, 1
      %p137 = scmp.eq.s32.totalorder %s22, 3
      %p138 = scmp.ne.s32.totalorder %s133, %s135
      %p139 = scmp.eq.s32.totalorder %s22, 0
      %p140 = por %p138, %p139
      %p141 = scmp.ne.s32.totalorder %s133, %s135
      %p142 = scmp.eq.s32.totalorder %s27, 3
      %p143 = por %p141, %p142
      %p144 = scmp.ne.s32.totalorder %s135, %s136
      %p145 = scmp.eq.s32.totalorder %s27, 0
      %p146 = por %p144, %p145
      %p147 = scmp.ne.s32.totalorder %s135, %s136
      %p148 = scmp.eq.s32.totalorder %s28, 3
      %p149 = por %p147, %p148
      %p151 = scmp.ne.s32.totalorder %s136, %s150
      %p152 = scmp.eq.s32.totalorder %s28, 0
      %p153 = por %p151, %p152
      %s155 = sadd.s32 %s154, 1
      %p158 = scmp.eq.s32.totalorder %s22, 3
      %p159 = scmp.ne.s32.totalorder %s154, %s156
      %p160 = scmp.eq.s32.totalorder %s22, 0
      %p161 = por %p159, %p160
      %p162 = scmp.ne.s32.totalorder %s154, %s156
      %p163 = scmp.eq.s32.totalorder %s27, 3
      %p164 = por %p162, %p163
      %p165 = scmp.ne.s32.totalorder %s156, %s157
      %p166 = scmp.eq.s32.totalorder %s27, 0
      %p167 = por %p165, %p166
      %p168 = scmp.ne.s32.totalorder %s156, %s157
      %p169 = scmp.eq.s32.totalorder %s28, 3
      %p170 = por %p168, %p169
      %p172 = scmp.ne.s32.totalorder %s157, %s171
      %p173 = scmp.eq.s32.totalorder %s28, 0
      %p174 = por %p172, %p173
      %s176 = sadd.s32 %s175, 1
      %p179 = scmp.eq.s32.totalorder %s22, 3
      %p180 = scmp.ne.s32.totalorder %s175, %s177
      %p181 = scmp.eq.s32.totalorder %s22, 0
      %p182 = por %p180, %p181
      %p183 = scmp.ne.s32.totalorder %s175, %s177
      %p184 = scmp.eq.s32.totalorder %s27, 3
      %p185 = por %p183, %p184
      %p186 = scmp.ne.s32.totalorder %s177, %s178
      %p187 = scmp.eq.s32.totalorder %s27, 0
      %p188 = por %p186, %p187
      %p189 = scmp.ne.s32.totalorder %s177, %s178
      %p190 = scmp.eq.s32.totalorder %s28, 3
      %p191 = por %p189, %p190
      %p193 = scmp.ne.s32.totalorder %s178, %s192
      %p194 = scmp.eq.s32.totalorder %s28, 0
      %p195 = por %p193, %p194
      %s196 = ssub.s32 %s30, %s37
      %p197 = scmp.eq.s32.totalorder %s196, 0
      %s199 = sadd.s32 %s198, 1
      %s200 = scalar_select %p197, %s198, %s199
      %p203 = pneg %p197
      %p204 = scmp.eq.s32.totalorder %s22, 3
      %p205 = por %p203, %p204
      %p206 = scmp.ne.s32.totalorder %s198, %s201
      %p207 = scmp.eq.s32.totalorder %s22, 0
      %p208 = por %p206, %p207
      %p209 = scmp.ne.s32.totalorder %s198, %s201
      %p210 = scmp.eq.s32.totalorder %s27, 3
      %p211 = por %p209, %p210
      %p212 = scmp.ne.s32.totalorder %s201, %s202
      %p213 = scmp.eq.s32.totalorder %s27, 0
      %p214 = por %p212, %p213
      %p215 = scmp.ne.s32.totalorder %s201, %s202
      %p216 = scmp.eq.s32.totalorder %s28, 3
      %p217 = por %p215, %p216
      %p219 = scmp.ne.s32.totalorder %s202, %s218
      %p220 = scmp.eq.s32.totalorder %s28, 0
      %p221 = por %p219, %p220
      %s222 = ssub.s32 %s29, %s41
      %s223 = ssub.s32 %s30, %s37
      %s224 = sor.u32 %s222, %s223
      %p225 = scmp.eq.s32.totalorder %s224, 0
      %s227 = sadd.s32 %s226, 1
      %s228 = scalar_select %p225, %s226, %s227
      %p231 = pneg %p225
      %p232 = scmp.eq.s32.totalorder %s22, 3
      %p233 = por %p231, %p232
      %p234 = scmp.ne.s32.totalorder %s226, %s229
      %p235 = scmp.eq.s32.totalorder %s22, 0
      %p236 = por %p234, %p235
      %p237 = scmp.ne.s32.totalorder %s226, %s229
      %p238 = scmp.eq.s32.totalorder %s27, 3
      %p239 = por %p237, %p238
      %p240 = scmp.ne.s32.totalorder %s229, %s230
      %p241 = scmp.eq.s32.totalorder %s27, 0
      %p242 = por %p240, %p241
      %p243 = scmp.ne.s32.totalorder %s229, %s230
      %p244 = scmp.eq.s32.totalorder %s28, 3
      %p245 = por %p243, %p244
      %p247 = scmp.ne.s32.totalorder %s230, %s246
      %p248 = scmp.eq.s32.totalorder %s28, 0
      %p249 = por %p247, %p248
      %s250 = ssub.s32 %s29, %s41
      %s251 = ssub.s32 %s30, %s37
      %s252 = sor.u32 %s250, %s251
      %p253 = scmp.eq.s32.totalorder %s252, 0
      %s255 = sadd.s32 %s254, 1
      %s256 = scalar_select %p253, %s254, %s255
      %p259 = pneg %p253
      %p260 = scmp.eq.s32.totalorder %s22, 3
      %p261 = por %p259, %p260
      %p262 = scmp.ne.s32.totalorder %s254, %s257
      %p263 = scmp.eq.s32.totalorder %s22, 0
      %p264 = por %p262, %p263
      %p265 = scmp.ne.s32.totalorder %s254, %s257
      %p266 = scmp.eq.s32.totalorder %s27, 3
      %p267 = por %p265, %p266
      %p268 = scmp.ne.s32.totalorder %s257, %s258
      %p269 = scmp.eq.s32.totalorder %s27, 0
      %p270 = por %p268, %p269
      %p271 = scmp.ne.s32.totalorder %s257, %s258
      %p272 = scmp.eq.s32.totalorder %s28, 3
      %p273 = por %p271, %p272
      %p275 = scmp.ne.s32.totalorder %s258, %s274
      %p276 = scmp.eq.s32.totalorder %s28, 0
      %p277 = por %p275, %p276
      %p278 = scmp.le.s32.totalorder 1, %s22
      %p279 = scmp.lt.s32.totalorder %s22, 5
      %p280 = pnand %p278, %p279
      %p281 = pneg %p280
      // Predicated region
      $region9: #{tpu_custom_call.1} parent=5 // pred_check
        _
      $region10: #{tpu_custom_call.1} parent=5 // pred_check_branch
        %283 = sbr.rel (%p280) target = $region12
      $region11: #{tpu_custom_call.1} parent=5 // pred_region
        %s284 = ssub.s32 %s22, 1
        // Predicated region
        $region13: #{tpu_custom_call.1} parent=11 // pred_check
          %p285 = pneg %p83
        $region14: #{tpu_custom_call.1} parent=11 // pred_check_branch
          %287 = sbr.rel (%p285) target = $region16
        $region15: #{tpu_custom_call.1} parent=11 // pred_region
          _
        $region16: #{tpu_custom_call.1} parent=11 // pred_fallthru
          _
        // Predicated region
        $region17: #{tpu_custom_call.1} parent=11 // pred_check
          %p288 = pneg %p104
        $region18: #{tpu_custom_call.1} parent=11 // pred_check_branch
          %290 = sbr.rel (%p288) target = $region20
        $region19: #{tpu_custom_call.1} parent=11 // pred_region
          _
        $region20: #{tpu_custom_call.1} parent=11 // pred_fallthru
          _
        // Predicated region
        $region21: #{tpu_custom_call.1} parent=11 // pred_check
          %p291 = pneg %p125
        $region22: #{tpu_custom_call.1} parent=11 // pred_check_branch
          %293 = sbr.rel (%p291) target = $region24
        $region23: #{tpu_custom_call.1} parent=11 // pred_region
          _
        $region24: #{tpu_custom_call.1} parent=11 // pred_fallthru
          _
        // Predicated region
        $region25: #{tpu_custom_call.1} parent=11 // pred_check
          %p294 = pneg %p146
        $region26: #{tpu_custom_call.1} parent=11 // pred_check_branch
          %296 = sbr.rel (%p294) target = $region28
        $region27: #{tpu_custom_call.1} parent=11 // pred_region
          _
        $region28: #{tpu_custom_call.1} parent=11 // pred_fallthru
          _
        // Predicated region
        $region29: #{tpu_custom_call.1} parent=11 // pred_check
          %p297 = pneg %p167
        $region30: #{tpu_custom_call.1} parent=11 // pred_check_branch
          %299 = sbr.rel (%p297) target = $region32
        $region31: #{tpu_custom_call.1} parent=11 // pred_region
          _
        $region32: #{tpu_custom_call.1} parent=11 // pred_fallthru
          _
        // Predicated region
        $region33: #{tpu_custom_call.1} parent=11 // pred_check
          %p300 = pneg %p188
        $region34: #{tpu_custom_call.1} parent=11 // pred_check_branch
          %302 = sbr.rel (%p300) target = $region36
        $region35: #{tpu_custom_call.1} parent=11 // pred_region
          _
        $region36: #{tpu_custom_call.1} parent=11 // pred_fallthru
          _
      $region12: #{tpu_custom_call.1} parent=5 // pred_fallthru
        _
      %p303 = scmp.lt.s32.totalorder %s22, 4
      // Predicated region
      $region37: #{tpu_custom_call.1} parent=5 // pred_check
        %p304 = pneg %p303
      $region38: #{tpu_custom_call.1} parent=5 // pred_check_branch
        %306 = sbr.rel (%p304) target = $region40
      $region39: #{tpu_custom_call.1} parent=5 // pred_region
        // Predicated region
        $region41: #{tpu_custom_call.1} parent=39 // pred_check
          %p307 = pneg %p56
        $region42: #{tpu_custom_call.1} parent=39 // pred_check_branch
          %309 = sbr.rel (%p307) target = $region44
        $region43: #{tpu_custom_call.1} parent=39 // pred_region
          %p310 = scmp.lt.s32.totalorder %s29, 1
          %s311 = scalar_select %p310, %s29, 1
          %p312 = scmp.lt.s32.totalorder %s30, 1
          %s313 = scalar_select %p312, %s30, 1
          %s314 = smul.addr %s311, 2
          %s315 = sadd.s32 %s313, %s314
          %s316 = smul.addr %s315, 2
          %s317 = scalar_lea.vmem %s0, %s316
        $region44: #{tpu_custom_call.1} parent=39 // pred_fallthru
          _
        // Predicated region
        $region45: #{tpu_custom_call.1} parent=39 // pred_check
          %p318 = pneg %p208
        $region46: #{tpu_custom_call.1} parent=39 // pred_check_branch
          %320 = sbr.rel (%p318) target = $region48
        $region47: #{tpu_custom_call.1} parent=39 // pred_region
          %p321 = scmp.lt.s32.totalorder %s30, 1
          %s322 = scalar_select %p321, %s30, 1
          %s323 = smul.addr %s322, 2
          %s324 = scalar_lea.vmem %s7, %s323
        $region48: #{tpu_custom_call.1} parent=39 // pred_fallthru
          _
      $region40: #{tpu_custom_call.1} parent=5 // pred_fallthru
        _
      %p325 = scmp.le.s32.totalorder 1, %s22
      %p326 = scmp.lt.s32.totalorder %s22, 5
      %p327 = pnand %p325, %p326
      %p328 = pneg %p327
      // Predicated region
      $region49: #{tpu_custom_call.1} parent=5 // pred_check
        _
      $region50: #{tpu_custom_call.1} parent=5 // pred_check_branch
        %330 = sbr.rel (%p327) target = $region52
      $region51: #{tpu_custom_call.1} parent=5 // pred_region
        %s331 = ssub.s32 %s22, 1
        %p332 = scmp.lt.s32.totalorder %s31, 1
        %s333 = scalar_select %p332, %s31, 1
        %p334 = scmp.lt.s32.totalorder %s32, 1
        %s335 = scalar_select %p334, %s32, 1
        %s336 = smul.addr %s333, 2
        %s337 = sadd.s32 %s335, %s336
        %s338 = smul.addr %s337, 2
        %s339 = scalar_lea.vmem %s0, %s338
        %p340 = pneg %p62
        %p341 = pneg %p59
        %p342 = pneg %p83
        %p343 = pneg %p80
        %p344 = pneg %p104
        %p345 = pneg %p101
        %p346 = pneg %p125
        %p347 = pneg %p122
        %p348 = pneg %p146
        %p349 = pneg %p143
        %p350 = pneg %p167
        %p351 = pneg %p164
        %p352 = pneg %p188
        %p353 = pneg %p185
        %p354 = scmp.lt.s32.totalorder %s32, 1
        %s355 = scalar_select %p354, %s32, 1
        %s356 = smul.addr %s355, 2
        %s357 = scalar_lea.vmem %s7, %s356
        %p358 = pneg %p214
        %p359 = pneg %p211
        %p360 = pneg %p242
        %p361 = pneg %p239
        %s362 = sand.u32 %s229, 1
        %s363 = scalar_lea.sflag [#allocation3], %s362
        %s364 = sand.u32 %s229, 1
        %s365 = smul.addr %s364, 32
        %s366 = scalar_lea.vmem [#allocation2], %s365
        %p367 = pneg %p270
        %p368 = pneg %p267
        %s369 = sand.u32 %s257, 1
        %s370 = scalar_lea.sflag [#allocation5], %s369
        %s371 = sand.u32 %s257, 1
        %s372 = smul.addr %s371, 32
        %s373 = scalar_lea.vmem [#allocation4], %s372
        %p374 = scmp.lt.s32.totalorder %s31, 1
        %s375 = scalar_select %p374, %s31, 1
        %p376 = scmp.lt.s32.totalorder %s32, 1
        %s377 = scalar_select %p376, %s32, 1
        %s378 = smul.addr %s375, 2
        %s379 = sadd.s32 %s377, %s378
        %s380 = smul.addr %s379, 2
        %s381 = scalar_lea.vmem %s0, %s380
        %p382 = scmp.lt.s32.totalorder %s32, 1
        %s383 = scalar_select %p382, %s32, 1
        %s384 = smul.addr %s383, 2
        %s385 = scalar_lea.vmem %s7, %s384
        %v387 = vld [vmem:[%s1] sm:$0xf]
        %v388 = vld [vmem:[%s1 + $0x4] sm:$0xf]
        %v389 = vld [vmem:[%s1 + $0x8] sm:$0xf]
        %v390 = vld [vmem:[%s1 + $0xc] sm:$0xf]
        %v391 = vld [vmem:[%s381] sm:$0x3]
        %v392 = vld [vmem:[%s2] sm:$0xff]
        %v393 = vld [vmem:[%s2 + $0x8] sm:$0xff]
        %v394 = vld [vmem:[%s2 + $0x10] sm:$0xff]
        %v395 = vld [vmem:[%s2 + $0x18] sm:$0xff]
        %397 = vset.pattern.permute.xlu0 0
        %398 = vperm.xlu0 %397, %v392
        %v399 = vpop.permute.xlu0 %398
        %402 = vset.pattern.permute.xlu0 0
        %403 = vperm.xlu0 %402, %v393
        %v404 = vpop.permute.xlu0 %403
        %407 = vset.pattern.permute.xlu0 0
        %408 = vperm.xlu0 %407, %v394
        %v409 = vpop.permute.xlu0 %408
        %412 = vset.pattern.permute.xlu0 0
        %413 = vperm.xlu0 %412, %v395
        %v414 = vpop.permute.xlu0 %413
        %v420 = vunpack.c.l.b16 %v387
        %v421 = vunpack.c.l.b16 %v388
        %v422 = vunpack.c.l.b16 %v389
        %v423 = vunpack.c.l.b16 %v390
        %v424 = vpack.c.b16 %v421, %v420
        %v425 = vpack.c.b16 %v423, %v422
        %vm426 = vcmask 31744
        %v428 = vsel %vm426, %v424, 0
        %v431 = vsel %vm426, %v425, 0
        %vm433 = vcmask 1041408
        %v435 = vsel %vm433, %v391, 0
        %437 = vmatprep.subr.bf16.mxu0 0
        %438 = vmatpush1.bf16.msra.mxu0 %v435
        %439 = vmatprep.subr.bf16.mxu0 0
        %440 = vmatpush1.bf16.msra.mxu0 0
        %441 = vmatprep.subr.bf16.mxu0 0
        %442 = vmatpush1.bf16.msra.mxu0 0
        %443 = vmatprep.subr.bf16.mxu0 0
        %444 = vmatpush1.bf16.msra.mxu0 0
        %445 = vmatprep.subr.bf16.mxu0 0
        %446 = vmatpush1.bf16.msra.mxu0 0
        %447 = vmatprep.subr.bf16.mxu0 0
        %448 = vmatpush1.bf16.msra.mxu0 0
        %449 = vmatprep.subr.bf16.mxu0 0
        %450 = vmatpush1.bf16.msra.mxu0 0
        %451 = vmatprep.subr.bf16.mxu0 0
        %452 = vmatpush1.bf16.msra.mxu0 0
        %453 = vmatprep.subr.bf16.mxu0 0
        %454 = vmatpush1.bf16.msra.mxu0 0
        %455 = vmatprep.subr.bf16.mxu0 0
        %456 = vmatpush1.bf16.msra.mxu0 0
        %457 = vmatprep.subr.bf16.mxu0 0
        %458 = vmatpush1.bf16.msra.mxu0 0
        %459 = vmatprep.subr.bf16.mxu0 0
        %460 = vmatpush1.bf16.msra.mxu0 0
        %461 = vmatprep.subr.bf16.mxu0 0
        %462 = vmatpush1.bf16.msra.mxu0 0
        %463 = vmatprep.subr.bf16.mxu0 0
        %464 = vmatpush1.bf16.msra.mxu0 0
        %465 = vmatprep.subr.bf16.mxu0 0
        %466 = vmatpush1.bf16.msra.mxu0 0
        %467 = vmatprep.subr.bf16.mxu0 0
        %468 = vmatpush1.bf16.msra.mxu0 0
        %469 = vmatprep.mubr.bf16.mxu0 0
        %470 = vmatmul.mubr.bf16.gmra.mrb[0].mxu0 %v428
        %v471 = vpop.f32.mrb[0].mxu0
        %v472 = vadd.f32 %v399, %v471
        %v473 = vpop.f32.mrb[0].mxu0
        %v474 = vpop.f32.mrb[0].mxu0
        %v475 = vadd.f32 %v404, %v474
        %v476 = vpop.f32.mrb[0].mxu0
        %477 = vmatprep.mubr.bf16.mxu0 0
        %478 = vmatmul.mubr.bf16.gmra.mrb[0].mxu0 %v431
        %v479 = vpop.f32.mrb[0].mxu0
        %v480 = vadd.f32 %v409, %v479
        %v481 = vpop.f32.mrb[0].mxu0
        %v482 = vpop.f32.mrb[0].mxu0
        %v483 = vadd.f32 %v414, %v482
        %v484 = vpop.f32.mrb[0].mxu0
        %485 = vdwg.mxu0
        %486 = vst [vmem:[%s366] sm:$0xff] %v472
        %487 = vst [vmem:[%s366 + $0x8] sm:$0xff] %v475
        %488 = vst [vmem:[%s366 + $0x10] sm:$0xff] %v480
        %489 = vst [vmem:[%s366 + $0x18] sm:$0xff] %v483
        %v490 = vxor.u32 %v472, 2147483648
        %v491 = vxor.u32 %v475, 2147483648
        %v492 = vxor.u32 %v480, 2147483648
        %v493 = vxor.u32 %v483, 2147483648
        %v494 = vmul.f32 %v490, 1.442695
        %v495 = vpow.pop %v494
        %v496 = vmul.f32 %v491, 1.442695
        %v497 = vpow.pop %v496
        %v498 = vmul.f32 %v492, 1.442695
        %v499 = vpow.pop %v498
        %v500 = vmul.f32 %v493, 1.442695
        %v501 = vpow.pop %v500
        %v502 = vadd.f32 %v495, 1.0
        %v503 = vadd.f32 %v497, 1.0
        %v504 = vadd.f32 %v499, 1.0
        %v505 = vadd.f32 %v501, 1.0
        %v506 = vrcp.pop %v502
        %v507 = vmul.f32 1.0, %v506
        %v508 = vrcp.pop %v503
        %v509 = vmul.f32 1.0, %v508
        %v510 = vrcp.pop %v504
        %v511 = vmul.f32 1.0, %v510
        %v512 = vrcp.pop %v505
        %v513 = vmul.f32 1.0, %v512
        %v514 = vadd.f32 %v507, %v507
        %v515 = vadd.f32 %v509, %v509
        %v516 = vadd.f32 %v511, %v511
        %v517 = vadd.f32 %v513, %v513
        %v518 = vld [vmem:[%s3] sm:$0xff]
        %v519 = vld [vmem:[%s3 + $0x8] sm:$0xff]
        %v520 = vld [vmem:[%s3 + $0x10] sm:$0xff]
        %v521 = vld [vmem:[%s3 + $0x18] sm:$0xff]
        %v522 = vld [vmem:[%s385] sm:$0x1]
        %524 = vset.pattern.permute.xlu0 0
        %525 = vperm.xlu0 %524, %v518
        %v526 = vpop.permute.xlu0 %525
        %529 = vset.pattern.permute.xlu0 0
        %530 = vperm.xlu0 %529, %v519
        %v531 = vpop.permute.xlu0 %530
        %534 = vset.pattern.permute.xlu0 0
        %535 = vperm.xlu0 %534, %v520
        %v536 = vpop.permute.xlu0 %535
        %539 = vset.pattern.permute.xlu0 0
        %540 = vperm.xlu0 %539, %v521
        %v541 = vpop.permute.xlu0 %540
        %v543 = vlaneseq
        %v544 = vshrl.u32 %v543, 7
        %v545 = vsub.s32 0, %v544
        %v546 = vrot.slane %v522, %v545
        %v547 = vmul.f32 %v526, %v546
        %v548 = vmul.f32 %v531, %v546
        %v549 = vmul.f32 %v536, %v546
        %v550 = vmul.f32 %v541, %v546
        %v551 = vld [vmem:[%s4] sm:$0xff]
        %v552 = vld [vmem:[%s4 + $0x8] sm:$0xff]
        %v553 = vld [vmem:[%s4 + $0x10] sm:$0xff]
        %v554 = vld [vmem:[%s4 + $0x18] sm:$0xff]
        %v555 = vld [vmem:[%s385 + $0x1] sm:$0x1]
        %557 = vset.pattern.permute.xlu0 0
        %558 = vperm.xlu0 %557, %v551
        %v559 = vpop.permute.xlu0 %558
        %562 = vset.pattern.permute.xlu0 0
        %563 = vperm.xlu0 %562, %v552
        %v564 = vpop.permute.xlu0 %563
        %567 = vset.pattern.permute.xlu0 0
        %568 = vperm.xlu0 %567, %v553
        %v569 = vpop.permute.xlu0 %568
        %572 = vset.pattern.permute.xlu0 0
        %573 = vperm.xlu0 %572, %v554
        %v574 = vpop.permute.xlu0 %573
        %v576 = vlaneseq
        %v577 = vshrl.u32 %v576, 7
        %v578 = vsub.s32 0, %v577
        %v579 = vrot.slane %v555, %v578
        %v580 = vmul.f32 %v559, %v579
        %v581 = vmul.f32 %v564, %v579
        %v582 = vmul.f32 %v569, %v579
        %v583 = vmul.f32 %v574, %v579
        %v584 = vadd.f32 %v547, %v580
        %v585 = vadd.f32 %v548, %v581
        %v586 = vadd.f32 %v549, %v582
        %v587 = vadd.f32 %v550, %v583
        %v588 = vadd.f32 %v514, %v584
        %v589 = vadd.f32 %v515, %v585
        %v590 = vadd.f32 %v516, %v586
        %v591 = vadd.f32 %v517, %v587
        %v592 = vmul.f32 %v588, 8.0
        %v593 = vmul.f32 %v589, 8.0
        %v594 = vmul.f32 %v590, 8.0
        %v595 = vmul.f32 %v591, 8.0
        %v596 = vmul.f32 %v514, %v514
        %v597 = vmul.f32 %v515, %v515
        %v598 = vmul.f32 %v516, %v516
        %v599 = vmul.f32 %v517, %v517
        %v600 = vld [vmem:[%s6] sm:$0xff]
        %v601 = vld [vmem:[%s6 + $0x8] sm:$0xff]
        %v602 = vld [vmem:[%s6 + $0x10] sm:$0xff]
        %v603 = vld [vmem:[%s6 + $0x18] sm:$0xff]
        %605 = vset.pattern.permute.xlu0 0
        %606 = vperm.xlu0 %605, %v600
        %v607 = vpop.permute.xlu0 %606
        %610 = vset.pattern.permute.xlu0 0
        %611 = vperm.xlu0 %610, %v601
        %v612 = vpop.permute.xlu0 %611
        %615 = vset.pattern.permute.xlu0 0
        %616 = vperm.xlu0 %615, %v602
        %v617 = vpop.permute.xlu0 %616
        %620 = vset.pattern.permute.xlu0 0
        %621 = vperm.xlu0 %620, %v603
        %v622 = vpop.permute.xlu0 %621
        %v624 = vmul.f32 %v596, %v607
        %v625 = vmul.f32 %v597, %v612
        %v626 = vmul.f32 %v598, %v617
        %v627 = vmul.f32 %v599, %v622
        %v628 = vadd.f32 %v518, %v551
        %v629 = vadd.f32 %v519, %v552
        %v630 = vadd.f32 %v520, %v553
        %v631 = vadd.f32 %v521, %v554
        %v632 = vsub.f32 %v592, %v507
        %v633 = vsub.f32 %v593, %v509
        %v634 = vsub.f32 %v594, %v511
        %v635 = vsub.f32 %v595, %v513
        %637 = vset.pattern.permute.xlu0 0
        %638 = vperm.xlu0 %637, %v628
        %v639 = vpop.permute.xlu0 %638
        %642 = vset.pattern.permute.xlu0 0
        %643 = vperm.xlu0 %642, %v629
        %v644 = vpop.permute.xlu0 %643
        %647 = vset.pattern.permute.xlu0 0
        %648 = vperm.xlu0 %647, %v630
        %v649 = vpop.permute.xlu0 %648
        %652 = vset.pattern.permute.xlu0 0
        %653 = vperm.xlu0 %652, %v631
        %v654 = vpop.permute.xlu0 %653
        %v656 = vmul.f32 %v639, %v632
        %v657 = vmul.f32 %v644, %v633
        %v658 = vmul.f32 %v649, %v634
        %v659 = vmul.f32 %v654, %v635
        %v660 = vadd.f32 %v507, %v656
        %v661 = vadd.f32 %v509, %v657
        %v662 = vadd.f32 %v511, %v658
        %v663 = vadd.f32 %v513, %v659
        %v664 = vld [vmem:[%s5] sm:$0xff]
        %v665 = vld [vmem:[%s5 + $0x8] sm:$0xff]
        %v666 = vld [vmem:[%s5 + $0x10] sm:$0xff]
        %v667 = vld [vmem:[%s5 + $0x18] sm:$0xff]
        %v668 = vsub.f32 %v624, %v507
        %v669 = vsub.f32 %v625, %v509
        %v670 = vsub.f32 %v626, %v511
        %v671 = vsub.f32 %v627, %v513
        %673 = vset.pattern.permute.xlu0 0
        %674 = vperm.xlu0 %673, %v664
        %v675 = vpop.permute.xlu0 %674
        %678 = vset.pattern.permute.xlu0 0
        %679 = vperm.xlu0 %678, %v665
        %v680 = vpop.permute.xlu0 %679
        %683 = vset.pattern.permute.xlu0 0
        %684 = vperm.xlu0 %683, %v666
        %v685 = vpop.permute.xlu0 %684
        %688 = vset.pattern.permute.xlu0 0
        %689 = vperm.xlu0 %688, %v667
        %v690 = vpop.permute.xlu0 %689
        %v692 = vmul.f32 %v675, %v668
        %v693 = vmul.f32 %v680, %v669
        %v694 = vmul.f32 %v685, %v670
        %v695 = vmul.f32 %v690, %v671
        %v696 = vadd.f32 %v660, %v692
        %v697 = vadd.f32 %v661, %v693
        %v698 = vadd.f32 %v662, %v694
        %v699 = vadd.f32 %v663, %v695
        %700 = vst [vmem:[%s373] sm:$0xff] %v696
        %701 = vst [vmem:[%s373 + $0x8] sm:$0xff] %v697
        %702 = vst [vmem:[%s373 + $0x10] sm:$0xff] %v698
        %703 = vst [vmem:[%s373 + $0x18] sm:$0xff] %v699
        %s704 = sand.u32 %s229, 1
        %s705 = scalar_lea.sflag [#allocation3], %s704
        %s706 = sand.u32 %s229, 1
        %s707 = smul.addr %s706, 32
        %s708 = scalar_lea.vmem [#allocation2], %s707
        %s709 = sand.u32 %s257, 1
        %s710 = scalar_lea.sflag [#allocation5], %s709
        %s711 = sand.u32 %s257, 1
        %s712 = smul.addr %s711, 32
        %s713 = scalar_lea.vmem [#allocation4], %s712
        // Predicated region
        $region53: #{tpu_custom_call.1} parent=51 // pred_check
          %p714 = pneg %p239
        $region54: #{tpu_custom_call.1} parent=51 // pred_check_branch
          %716 = sbr.rel (%p714) target = $region56
        $region55: #{tpu_custom_call.1} parent=51 // pred_region
          %s718 = ssub.s32 512, 512
          %719 = vsyncadd %s705, %s718
          %s720 = smul.addr %s31, 8
          %s721 = sadd.s32 %s32, %s720
          %s722 = smul.addr %s721, 128
          %s723 = scalar_lea.hbm %s8, %s722
          %s724 = sshll.u32 %s708, 4
          %s725 = int_to_ptr.vmem [resolvable:$true] %s724
          %730 = dma.vmem_to_hbm [thread:$0]  %s725, 512, %s723, %s705, 128, 256, 8
        $region56: #{tpu_custom_call.1} parent=51 // pred_fallthru
          _
        // Predicated region
        $region57: #{tpu_custom_call.1} parent=51 // pred_check
          %p731 = pneg %p267
        $region58: #{tpu_custom_call.1} parent=51 // pred_check_branch
          %733 = sbr.rel (%p731) target = $region60
        $region59: #{tpu_custom_call.1} parent=51 // pred_region
          %s735 = ssub.s32 512, 512
          %736 = vsyncadd %s710, %s735
          %s737 = smul.addr %s31, 8
          %s738 = sadd.s32 %s32, %s737
          %s739 = smul.addr %s738, 128
          %s740 = scalar_lea.hbm %s9, %s739
          %s741 = sshll.u32 %s713, 4
          %s742 = int_to_ptr.vmem [resolvable:$true] %s741
          %747 = dma.vmem_to_hbm [thread:$0]  %s742, 512, %s740, %s710, 128, 256, 8
        $region60: #{tpu_custom_call.1} parent=51 // pred_fallthru
          _
      $region52: #{tpu_custom_call.1} parent=5 // pred_fallthru
        _
      %p748 = scmp.le.s32.totalorder 2, %s22
      // Predicated region
      $region61: #{tpu_custom_call.1} parent=5 // pred_check
        %p749 = pneg %p748
      $region62: #{tpu_custom_call.1} parent=5 // pred_check_branch
        %751 = sbr.rel (%p749) target = $region64
      $region63: #{tpu_custom_call.1} parent=5 // pred_region
        %s752 = ssub.s32 %s22, 2
        // Predicated region
        $region65: #{tpu_custom_call.1} parent=63 // pred_check
          %p753 = pneg %p245
        $region66: #{tpu_custom_call.1} parent=63 // pred_check_branch
          %755 = sbr.rel (%p753) target = $region68
        $region67: #{tpu_custom_call.1} parent=63 // pred_region
          %s756 = sand.u32 %s230, 1
          %s757 = scalar_lea.sflag [#allocation3], %s756
          %s758 = sand.u32 %s230, 1
          %s759 = smul.addr %s758, 32
          %s760 = scalar_lea.vmem [#allocation2], %s759
          %761 = dma.done %s757, 512
        $region68: #{tpu_custom_call.1} parent=63 // pred_fallthru
          _
        // Predicated region
        $region69: #{tpu_custom_call.1} parent=63 // pred_check
          %p762 = pneg %p273
        $region70: #{tpu_custom_call.1} parent=63 // pred_check_branch
          %764 = sbr.rel (%p762) target = $region72
        $region71: #{tpu_custom_call.1} parent=63 // pred_region
          %s765 = sand.u32 %s258, 1
          %s766 = scalar_lea.sflag [#allocation5], %s765
          %s767 = sand.u32 %s258, 1
          %s768 = smul.addr %s767, 32
          %s769 = scalar_lea.vmem [#allocation4], %s768
          %770 = dma.done %s766, 512
        $region72: #{tpu_custom_call.1} parent=63 // pred_fallthru
          _
      $region64: #{tpu_custom_call.1} parent=5 // pred_fallthru
        _
    $region6: #{tpu_custom_call.1} parent=1 // loop_footer
      %s26 = sadd.s32 1, %s22
    $region7: #{tpu_custom_call.1} parent=1 // loop_footer_branch
      %21 = sbr.rel target = $region3
    $region8: #{tpu_custom_call.1} parent=1 // loop_exit
      _
    %771 = vsyncpa [#allocation3], 1
    %s772 = scalar_lea.sflag [#allocation3], 1
    %773 = vsyncpa %s772, 1
    %774 = vsyncpa [#allocation5], 1
    %s775 = scalar_lea.sflag [#allocation5], 1
    %776 = vsyncpa %s775, 1

</llo_original>
